<compile_context>
chip_gen: v7x
topology: tpu7x:2x2x1
jax: 0.10.0
libtpu: 0.0.40
codegen_flags: <defaults>
</compile_context>

<pallas_src>
import functools

import jax
import jax.numpy as jnp
from jax import lax
from jax.experimental import pallas as pl
from jax.experimental.pallas import tpu as pltpu

# Layer dims of the PyTorch DNN: 49 -> 64 -> 128 -> 256 -> 64 -> 8
IN_FEATURES = 49
IN_PAD = 64          # zero-padded contraction dim (exact; padded x columns are 0)
H1, H2, H3, H4, OUT = 64, 128, 256, 64, 8


def _round_up(n, m):
    return ((n + m - 1) // m) * m


def mlp_kernel(x_ref,
               w1_ref, b1_ref,
               w2_ref, b2_ref,
               w3_ref, b3_ref,
               w4_ref, b4_ref,
               w5t_ref, b5t_ref,
               ot_ref):
    """One batch tile of the whole MLP.

    x_ref : (TB, 64)  bf16  zero-padded input tile (streamed per grid step)
    wN    : bf16 (in, out); bN: f32 (1, out)  -- resident across grid steps
    w5t   : bf16 (8, 64)  (last layer weight, pre-transposed)
    b5t   : f32  (8, 1)
    ot_ref: (8, TB) f32   transposed, lane-dense output tile
    """
    f32 = jnp.float32

    h = jnp.dot(x_ref[...], w1_ref[...], preferred_element_type=f32) + b1_ref[...]
    h = jnp.maximum(h, 0.0).astype(jnp.bfloat16)   # ReLU; Dropout = identity (eval)

    h = jnp.dot(h, w2_ref[...], preferred_element_type=f32) + b2_ref[...]
    h = jnp.maximum(h, 0.0).astype(jnp.bfloat16)

    h = jnp.dot(h, w3_ref[...], preferred_element_type=f32) + b3_ref[...]
    h = jnp.maximum(h, 0.0).astype(jnp.bfloat16)

    h = jnp.dot(h, w4_ref[...], preferred_element_type=f32) + b4_ref[...]
    h = jnp.maximum(h, 0.0).astype(jnp.bfloat16)   # (TB, 64)

    # Final layer, produced transposed: (8, TB) = w5t (8,64) contracted with
    # h (TB,64) over their last dims -> the output store is lane-dense
    # (last dim TB, a multiple of 128) instead of 8-wide masked stores.
    ot = lax.dot_general(w5t_ref[...], h,
                         dimension_numbers=(((1,), (1,)), ((), ())),
                         preferred_element_type=f32)
    ot_ref[...] = (ot + b5t_ref[...]).astype(ot_ref.dtype)


def prepare_params(params):
    """Convert f32 params [(W(in,out), b(out,))...] into the kernel layout:
       W1 zero-padded 49->64, weights bf16, biases f32 (1,out), last layer
       stored transposed as (8,64)/(8,1)."""
    (w1, b1), (w2, b2), (w3, b3), (w4, b4), (w5, b5) = params
    w1p = jnp.zeros((IN_PAD, H1), jnp.float32).at[:IN_FEATURES].set(w1)
    return (
        w1p.astype(jnp.bfloat16), b1.reshape(1, H1).astype(jnp.float32),
        w2.astype(jnp.bfloat16), b2.reshape(1, H2).astype(jnp.float32),
        w3.astype(jnp.bfloat16), b3.reshape(1, H3).astype(jnp.float32),
        w4.astype(jnp.bfloat16), b4.reshape(1, H4).astype(jnp.float32),
        w5.T.astype(jnp.bfloat16), b5.reshape(OUT, 1).astype(jnp.float32),
    )


@functools.partial(jax.jit, static_argnames=("block_b",))
def dnn_forward(x, kernel_params, block_b=1024):
    """x: (B, 49) float32 -> (B, 8) float32."""
    B = x.shape[0]
    TB = min(_round_up(block_b, 128), _round_up(B, 128))   # batch tile, multiple of 128
    Bp = _round_up(B, TB)
    num_tiles = Bp // TB

    # Pad batch to a tile multiple and features 49 -> 64; stream x as bf16.
    xp = jnp.pad(x.astype(jnp.bfloat16),
                 ((0, Bp - B), (0, IN_PAD - IN_FEATURES)))

    const = lambda i: (0, 0)   # weights/biases: same block every step -> stay resident
    wb_shapes = [(IN_PAD, H1), (1, H1),
                 (H1, H2), (1, H2),
                 (H2, H3), (1, H3),
                 (H3, H4), (1, H4),
                 (OUT, H4), (OUT, 1)]
    in_specs = [pl.BlockSpec((TB, IN_PAD), lambda i: (i, 0))] + \
               [pl.BlockSpec(s, const) for s in wb_shapes]

    out_t = pl.pallas_call(
        mlp_kernel,
        out_shape=jax.ShapeDtypeStruct((OUT, Bp), jnp.float32),
        grid=(num_tiles,),
        in_specs=in_specs,
        out_specs=pl.BlockSpec((OUT, TB), lambda i: (0, i)),
        compiler_params=pltpu.CompilerParams(
            dimension_semantics=("parallel",),   # shard batch tiles across TCs (v7x)
        ),
    )(xp, *kernel_params)

    return out_t.T[:B]   # back to (B, 8)


def init_params(key):
    """PyTorch-style default Linear init: U(-1/sqrt(fan_in), 1/sqrt(fan_in))."""
    dims = [(IN_FEATURES, H1), (H1, H2), (H2, H3), (H3, H4), (H4, OUT)]
    params = []
    for fan_in, fan_out in dims:
        key, kw, kb = jax.random.split(key, 3)
        bound = 1.0 / jnp.sqrt(fan_in)
        w = jax.random.uniform(kw, (fan_in, fan_out), jnp.float32, -bound, bound)
        b = jax.random.uniform(kb, (fan_out,), jnp.float32, -bound, bound)
        params.append((w, b))
    return params


def dnn_reference(x, params):
    h = x
    for i, (w, b) in enumerate(params):
        h = h @ w + b
        if i < len(params) - 1:
            h = jnp.maximum(h, 0.0)
    return h


if __name__ == "__main__":
    key = jax.random.PRNGKey(0)
    kx, kp = jax.random.split(key)

    params = init_params(kp)
    kparams = prepare_params(params)

    # Small-shape correctness check (module-consistent: features=49, out=8).
    B = 8
    x = jax.random.normal(kx, (B, IN_FEATURES), jnp.float32)
    out = jax.block_until_ready(dnn_forward(x, kparams))
    ref = dnn_reference(x, params)
    assert out.shape == (B, OUT), out.shape
    assert jnp.allclose(out, ref, atol=5e-2, rtol=5e-2), \
        float(jnp.max(jnp.abs(out - ref)))

    # Exercise the multi-tile grid path (batch not a multiple of the tile).
    B2 = 1000
    x2 = jax.random.normal(jax.random.PRNGKey(1), (B2, IN_FEATURES), jnp.float32)
    out2 = jax.block_until_ready(dnn_forward(x2, kparams, block_b=256))
    ref2 = dnn_reference(x2, params)
    assert out2.shape == (B2, OUT), out2.shape
    assert jnp.allclose(out2, ref2, atol=5e-2, rtol=5e-2), \
        float(jnp.max(jnp.abs(out2 - ref2)))

    print("KERNEL_OK")
</pallas_src>

<mosaic_0001>
module attributes {stable_mosaic.version = 11 : i64} {
  func.func @mlp_kernel(%arg0: i32, %arg1: memref<128x64xbf16, #tpu.memory_space<vmem>>, %arg2: memref<64x64xbf16, #tpu.memory_space<vmem>>, %arg3: memref<1x64xf32, #tpu.memory_space<vmem>>, %arg4: memref<64x128xbf16, #tpu.memory_space<vmem>>, %arg5: memref<1x128xf32, #tpu.memory_space<vmem>>, %arg6: memref<128x256xbf16, #tpu.memory_space<vmem>>, %arg7: memref<1x256xf32, #tpu.memory_space<vmem>>, %arg8: memref<256x64xbf16, #tpu.memory_space<vmem>>, %arg9: memref<1x64xf32, #tpu.memory_space<vmem>>, %arg10: memref<8x64xbf16, #tpu.memory_space<vmem>>, %arg11: memref<8x1xf32, #tpu.memory_space<vmem>>, %arg12: memref<8x128xf32, #tpu.memory_space<vmem>>) attributes {dimension_semantics = [#tpu.dimension_semantics<parallel>], iteration_bounds = array<i64: 1>, scalar_prefetch = 0 : i64, scratch_operands = 0 : i64, tpu.core_type = #tpu.core_type<tc>, window_params = [{transform_indices = @transform_0, window_bounds = array<i64: 128, 64>}, {pipeline_mode = #tpu.pipeline_mode<synchronous>, transform_indices = @transform_1, window_bounds = array<i64: 64, 64>}, {pipeline_mode = #tpu.pipeline_mode<synchronous>, transform_indices = @transform_2, window_bounds = array<i64: 1, 64>}, {pipeline_mode = #tpu.pipeline_mode<synchronous>, transform_indices = @transform_3, window_bounds = array<i64: 64, 128>}, {pipeline_mode = #tpu.pipeline_mode<synchronous>, transform_indices = @transform_4, window_bounds = array<i64: 1, 128>}, {pipeline_mode = #tpu.pipeline_mode<synchronous>, transform_indices = @transform_5, window_bounds = array<i64: 128, 256>}, {pipeline_mode = #tpu.pipeline_mode<synchronous>, transform_indices = @transform_6, window_bounds = array<i64: 1, 256>}, {pipeline_mode = #tpu.pipeline_mode<synchronous>, transform_indices = @transform_7, window_bounds = array<i64: 256, 64>}, {pipeline_mode = #tpu.pipeline_mode<synchronous>, transform_indices = @transform_8, window_bounds = array<i64: 1, 64>}, {pipeline_mode = #tpu.pipeline_mode<synchronous>, transform_indices = @transform_9, window_bounds = array<i64: 8, 64>}, {pipeline_mode = #tpu.pipeline_mode<synchronous>, transform_indices = @transform_10, window_bounds = array<i64: 8, 1>}, {transform_indices = @transform_11, window_bounds = array<i64: 8, 128>}]} {
    %c0 = arith.constant 0 : index
    %c0_0 = arith.constant 0 : index
    %0 = vector.load %arg1[%c0, %c0_0] : memref<128x64xbf16, #tpu.memory_space<vmem>>, vector<128x64xbf16>
    %c0_1 = arith.constant 0 : index
    %c0_2 = arith.constant 0 : index
    %1 = vector.load %arg2[%c0_1, %c0_2] : memref<64x64xbf16, #tpu.memory_space<vmem>>, vector<64x64xbf16>
    %cst = arith.constant dense<0.000000e+00> : vector<128x64xf32>
    %2 = tpu.matmul %0, %1, %cst {dimension_numbers = #tpu.dot_dimension_numbers<[1], [0], [0], [1], [0, 0, 1, 1], [], []>} : vector<128x64xbf16>, vector<64x64xbf16>, vector<128x64xf32> -> vector<128x64xf32>
    %c0_3 = arith.constant 0 : index
    %c0_4 = arith.constant 0 : index
    %3 = vector.load %arg3[%c0_3, %c0_4] : memref<1x64xf32, #tpu.memory_space<vmem>>, vector<1x64xf32>
    %4 = vector.broadcast %3 : vector<1x64xf32> to vector<128x64xf32>
    %5 = arith.addf %2, %4 : vector<128x64xf32>
    %cst_5 = arith.constant 0.000000e+00 : f32
    %6 = vector.broadcast %cst_5 : f32 to vector<128x64xf32>
    %7 = arith.maximumf %5, %6 : vector<128x64xf32>
    %8 = arith.truncf %7 : vector<128x64xf32> to vector<128x64xbf16>
    %c0_6 = arith.constant 0 : index
    %c0_7 = arith.constant 0 : index
    %9 = vector.load %arg4[%c0_6, %c0_7] : memref<64x128xbf16, #tpu.memory_space<vmem>>, vector<64x128xbf16>
    %cst_8 = arith.constant dense<0.000000e+00> : vector<128x128xf32>
    %10 = tpu.matmul %8, %9, %cst_8 {dimension_numbers = #tpu.dot_dimension_numbers<[1], [0], [0], [1], [0, 0, 1, 1], [], []>} : vector<128x64xbf16>, vector<64x128xbf16>, vector<128x128xf32> -> vector<128x128xf32>
    %c0_9 = arith.constant 0 : index
    %c0_10 = arith.constant 0 : index
    %11 = vector.load %arg5[%c0_9, %c0_10] : memref<1x128xf32, #tpu.memory_space<vmem>>, vector<1x128xf32>
    %12 = vector.broadcast %11 : vector<1x128xf32> to vector<128x128xf32>
    %13 = arith.addf %10, %12 : vector<128x128xf32>
    %cst_11 = arith.constant 0.000000e+00 : f32
    %14 = vector.broadcast %cst_11 : f32 to vector<128x128xf32>
    %15 = arith.maximumf %13, %14 : vector<128x128xf32>
    %16 = arith.truncf %15 : vector<128x128xf32> to vector<128x128xbf16>
    %c0_12 = arith.constant 0 : index
    %c0_13 = arith.constant 0 : index
    %17 = vector.load %arg6[%c0_12, %c0_13] : memref<128x256xbf16, #tpu.memory_space<vmem>>, vector<128x256xbf16>
    %cst_14 = arith.constant dense<0.000000e+00> : vector<128x256xf32>
    %18 = tpu.matmul %16, %17, %cst_14 {dimension_numbers = #tpu.dot_dimension_numbers<[1], [0], [0], [1], [0, 0, 1, 1], [], []>} : vector<128x128xbf16>, vector<128x256xbf16>, vector<128x256xf32> -> vector<128x256xf32>
    %c0_15 = arith.constant 0 : index
    %c0_16 = arith.constant 0 : index
    %19 = vector.load %arg7[%c0_15, %c0_16] : memref<1x256xf32, #tpu.memory_space<vmem>>, vector<1x256xf32>
    %20 = vector.broadcast %19 : vector<1x256xf32> to vector<128x256xf32>
    %21 = arith.addf %18, %20 : vector<128x256xf32>
    %cst_17 = arith.constant 0.000000e+00 : f32
    %22 = vector.broadcast %cst_17 : f32 to vector<128x256xf32>
    %23 = arith.maximumf %21, %22 : vector<128x256xf32>
    %24 = arith.truncf %23 : vector<128x256xf32> to vector<128x256xbf16>
    %c0_18 = arith.constant 0 : index
    %c0_19 = arith.constant 0 : index
    %25 = vector.load %arg8[%c0_18, %c0_19] : memref<256x64xbf16, #tpu.memory_space<vmem>>, vector<256x64xbf16>
    %cst_20 = arith.constant dense<0.000000e+00> : vector<128x64xf32>
    %26 = tpu.matmul %24, %25, %cst_20 {dimension_numbers = #tpu.dot_dimension_numbers<[1], [0], [0], [1], [0, 0, 1, 1], [], []>} : vector<128x256xbf16>, vector<256x64xbf16>, vector<128x64xf32> -> vector<128x64xf32>
    %c0_21 = arith.constant 0 : index
    %c0_22 = arith.constant 0 : index
    %27 = vector.load %arg9[%c0_21, %c0_22] : memref<1x64xf32, #tpu.memory_space<vmem>>, vector<1x64xf32>
    %28 = vector.broadcast %27 : vector<1x64xf32> to vector<128x64xf32>
    %29 = arith.addf %26, %28 : vector<128x64xf32>
    %cst_23 = arith.constant 0.000000e+00 : f32
    %30 = vector.broadcast %cst_23 : f32 to vector<128x64xf32>
    %31 = arith.maximumf %29, %30 : vector<128x64xf32>
    %32 = arith.truncf %31 : vector<128x64xf32> to vector<128x64xbf16>
    %c0_24 = arith.constant 0 : index
    %c0_25 = arith.constant 0 : index
    %33 = vector.load %arg10[%c0_24, %c0_25] : memref<8x64xbf16, #tpu.memory_space<vmem>>, vector<8x64xbf16>
    %cst_26 = arith.constant dense<0.000000e+00> : vector<8x128xf32>
    %34 = tpu.matmul %33, %32, %cst_26 {dimension_numbers = #tpu.dot_dimension_numbers<[1], [1], [0], [0], [0, 0, 1, 0], [], []>} : vector<8x64xbf16>, vector<128x64xbf16>, vector<8x128xf32> -> vector<8x128xf32>
    %c0_27 = arith.constant 0 : index
    %c0_28 = arith.constant 0 : index
    %35 = vector.load %arg11[%c0_27, %c0_28] : memref<8x1xf32, #tpu.memory_space<vmem>>, vector<8x1xf32>
    %36 = vector.broadcast %35 : vector<8x1xf32> to vector<8x128xf32>
    %37 = arith.addf %34, %36 : vector<8x128xf32>
    %c0_29 = arith.constant 0 : index
    %c0_30 = arith.constant 0 : index
    %38 = vector.load %arg12[%c0_29, %c0_30] : memref<8x128xf32, #tpu.memory_space<vmem>>, vector<8x128xf32>
    tpu.vector_store %arg12[%c0_29, %c0_30], %37 {strides = array<i32>} : memref<8x128xf32, #tpu.memory_space<vmem>>, vector<8x128xf32>,
    return
  }
  func.func @transform_0(%arg0: i32) -> (i32, i32) {
    %c0_i32 = arith.constant 0 : i32
    %c0_i32_0 = arith.constant 0 : i32
    return %arg0, %c0_i32 : i32, i32
  }
  func.func @transform_1(%arg0: i32) -> (i32, i32) {
    %c0_i32 = arith.constant 0 : i32
    %c0_i32_0 = arith.constant 0 : i32
    %c0_i32_1 = arith.constant 0 : i32
    return %c0_i32, %c0_i32_0 : i32, i32
  }
  func.func @transform_2(%arg0: i32) -> (i32, i32) {
    %c0_i32 = arith.constant 0 : i32
    %c0_i32_0 = arith.constant 0 : i32
    %c0_i32_1 = arith.constant 0 : i32
    return %c0_i32, %c0_i32_0 : i32, i32
  }
  func.func @transform_3(%arg0: i32) -> (i32, i32) {
    %c0_i32 = arith.constant 0 : i32
    %c0_i32_0 = arith.constant 0 : i32
    %c0_i32_1 = arith.constant 0 : i32
    return %c0_i32, %c0_i32_0 : i32, i32
  }
  func.func @transform_4(%arg0: i32) -> (i32, i32) {
    %c0_i32 = arith.constant 0 : i32
    %c0_i32_0 = arith.constant 0 : i32
    %c0_i32_1 = arith.constant 0 : i32
    return %c0_i32, %c0_i32_0 : i32, i32
  }
  func.func @transform_5(%arg0: i32) -> (i32, i32) {
    %c0_i32 = arith.constant 0 : i32
    %c0_i32_0 = arith.constant 0 : i32
    %c0_i32_1 = arith.constant 0 : i32
    return %c0_i32, %c0_i32_0 : i32, i32
  }
  func.func @transform_6(%arg0: i32) -> (i32, i32) {
    %c0_i32 = arith.constant 0 : i32
    %c0_i32_0 = arith.constant 0 : i32
    %c0_i32_1 = arith.constant 0 : i32
    return %c0_i32, %c0_i32_0 : i32, i32
  }
  func.func @transform_7(%arg0: i32) -> (i32, i32) {
    %c0_i32 = arith.constant 0 : i32
    %c0_i32_0 = arith.constant 0 : i32
    %c0_i32_1 = arith.constant 0 : i32
    return %c0_i32, %c0_i32_0 : i32, i32
  }
  func.func @transform_8(%arg0: i32) -> (i32, i32) {
    %c0_i32 = arith.constant 0 : i32
    %c0_i32_0 = arith.constant 0 : i32
    %c0_i32_1 = arith.constant 0 : i32
    return %c0_i32, %c0_i32_0 : i32, i32
  }
  func.func @transform_9(%arg0: i32) -> (i32, i32) {
    %c0_i32 = arith.constant 0 : i32
    %c0_i32_0 = arith.constant 0 : i32
    %c0_i32_1 = arith.constant 0 : i32
    return %c0_i32, %c0_i32_0 : i32, i32
  }
  func.func @transform_10(%arg0: i32) -> (i32, i32) {
    %c0_i32 = arith.constant 0 : i32
    %c0_i32_0 = arith.constant 0 : i32
    %c0_i32_1 = arith.constant 0 : i32
    return %c0_i32, %c0_i32_0 : i32, i32
  }
  func.func @transform_11(%arg0: i32) -> (i32, i32) {
    %c0_i32 = arith.constant 0 : i32
    %c0_i32_0 = arith.constant 0 : i32
    return %c0_i32, %arg0 : i32, i32
  }
}

</mosaic_0001>

<llo_original>
// kernel: dnn_forward.1
$region0: #{dnn_forward.1}
  #allocation0 [shape = 'u32[]', space=smem, size = 0x4, offset = 0x4, fixed_abs, tag = 'smem constant byte address 0x4 - core index']
  #allocation1 [shape = 'u32[144,128]{1,0:T(1,128)}', space=vmem, size = 0x12000, scoped, tag = 'internal scratch']
  %s0 = inlined_call_operand.vmem [shape: bf16[128,64], index: 0, kind: input, shape index: {}]
  %s1 = inlined_call_operand.vmem [shape: bf16[64,64], index: 1, kind: input, shape index: {}]
  %s2 = inlined_call_operand.vmem [shape: f32[1,64], index: 2, kind: input, shape index: {}]
  %s3 = inlined_call_operand.vmem [shape: bf16[64,128], index: 3, kind: input, shape index: {}]
  %s4 = inlined_call_operand.vmem [shape: f32[1,128], index: 4, kind: input, shape index: {}]
  %s5 = inlined_call_operand.vmem [shape: bf16[128,256], index: 5, kind: input, shape index: {}]
  %s6 = inlined_call_operand.vmem [shape: f32[1,256], index: 6, kind: input, shape index: {}]
  %s7 = inlined_call_operand.vmem [shape: bf16[256,64], index: 7, kind: input, shape index: {}]
  %s8 = inlined_call_operand.vmem [shape: f32[1,64], index: 8, kind: input, shape index: {}]
  %s9 = inlined_call_operand.vmem [shape: bf16[8,64], index: 9, kind: input, shape index: {}]
  %s10 = inlined_call_operand.vmem [shape: f32[8,1], index: 10, kind: input, shape index: {}]
  %s11 = inlined_call_operand.vmem [shape: f32[8,128], index: 11, kind: output, shape index: {}]
  %s12 = sld [smem:[#allocation0]]
  $region54: #{dnn_forward.1} parent=0
    _
  %s14 = ssub.s32 1, %s12
  %s15 = scalar_select 0, %s14, %s12
  // Predicated region
  $region2: #{dnn_forward.1} parent=0 // pred_check
    _
  $region3: #{dnn_forward.1} parent=0 // pred_check_branch
    %17 = sbr.rel (0) target = $region5
  $region4: #{dnn_forward.1} parent=0 // pred_region
    _
  $region5: #{dnn_forward.1} parent=0 // pred_fallthru
    _
  // Predicated region
  $region6: #{dnn_forward.1} parent=0 // pred_check
    _
  $region7: #{dnn_forward.1} parent=0 // pred_check_branch
    %19 = sbr.rel (0) target = $region9
  $region8: #{dnn_forward.1} parent=0 // pred_region
    _
  $region9: #{dnn_forward.1} parent=0 // pred_fallthru
    _
  // Predicated region
  $region10: #{dnn_forward.1} parent=0 // pred_check
    _
  $region11: #{dnn_forward.1} parent=0 // pred_check_branch
    %21 = sbr.rel (0) target = $region13
  $region12: #{dnn_forward.1} parent=0 // pred_region
    _
  $region13: #{dnn_forward.1} parent=0 // pred_fallthru
    _
  // Predicated region
  $region14: #{dnn_forward.1} parent=0 // pred_check
    _
  $region15: #{dnn_forward.1} parent=0 // pred_check_branch
    %23 = sbr.rel (0) target = $region17
  $region16: #{dnn_forward.1} parent=0 // pred_region
    _
  $region17: #{dnn_forward.1} parent=0 // pred_fallthru
    _
  // Predicated region
  $region18: #{dnn_forward.1} parent=0 // pred_check
    _
  $region19: #{dnn_forward.1} parent=0 // pred_check_branch
    %25 = sbr.rel (0) target = $region21
  $region20: #{dnn_forward.1} parent=0 // pred_region
    _
  $region21: #{dnn_forward.1} parent=0 // pred_fallthru
    _
  // Predicated region
  $region22: #{dnn_forward.1} parent=0 // pred_check
    _
  $region23: #{dnn_forward.1} parent=0 // pred_check_branch
    %27 = sbr.rel (0) target = $region25
  $region24: #{dnn_forward.1} parent=0 // pred_region
    _
  $region25: #{dnn_forward.1} parent=0 // pred_fallthru
    _
  // Predicated region
  $region26: #{dnn_forward.1} parent=0 // pred_check
    _
  $region27: #{dnn_forward.1} parent=0 // pred_check_branch
    %29 = sbr.rel (0) target = $region29
  $region28: #{dnn_forward.1} parent=0 // pred_region
    _
  $region29: #{dnn_forward.1} parent=0 // pred_fallthru
    _
  // Predicated region
  $region30: #{dnn_forward.1} parent=0 // pred_check
    _
  $region31: #{dnn_forward.1} parent=0 // pred_check_branch
    %31 = sbr.rel (0) target = $region33
  $region32: #{dnn_forward.1} parent=0 // pred_region
    _
  $region33: #{dnn_forward.1} parent=0 // pred_fallthru
    _
  // Predicated region
  $region34: #{dnn_forward.1} parent=0 // pred_check
    _
  $region35: #{dnn_forward.1} parent=0 // pred_check_branch
    %33 = sbr.rel (0) target = $region37
  $region36: #{dnn_forward.1} parent=0 // pred_region
    _
  $region37: #{dnn_forward.1} parent=0 // pred_fallthru
    _
  // Predicated region
  $region38: #{dnn_forward.1} parent=0 // pred_check
    _
  $region39: #{dnn_forward.1} parent=0 // pred_check_branch
    %35 = sbr.rel (0) target = $region41
  $region40: #{dnn_forward.1} parent=0 // pred_region
    _
  $region41: #{dnn_forward.1} parent=0 // pred_fallthru
    _
  // Predicated region
  $region42: #{dnn_forward.1} parent=0 // pred_check
    _
  $region43: #{dnn_forward.1} parent=0 // pred_check_branch
    %37 = sbr.rel (0) target = $region45
  $region44: #{dnn_forward.1} parent=0 // pred_region
    _
  $region45: #{dnn_forward.1} parent=0 // pred_fallthru
    _
  %v39 = vld [vmem:[%s0] sm:$0xf]
  %v40 = vld [vmem:[%s0 + $0x4] sm:$0xf]
  %v41 = vld [vmem:[%s0 + $0x8] sm:$0xf]
  %v42 = vld [vmem:[%s0 + $0xc] sm:$0xf]
  %v43 = vld [vmem:[%s0 + $0x10] sm:$0xf]
  %v44 = vld [vmem:[%s0 + $0x14] sm:$0xf]
  %v45 = vld [vmem:[%s0 + $0x18] sm:$0xf]
  %v46 = vld [vmem:[%s0 + $0x1c] sm:$0xf]
  %v47 = vld [vmem:[%s0 + $0x20] sm:$0xf]
  %v48 = vld [vmem:[%s0 + $0x24] sm:$0xf]
  %v49 = vld [vmem:[%s0 + $0x28] sm:$0xf]
  %v50 = vld [vmem:[%s0 + $0x2c] sm:$0xf]
  %v51 = vld [vmem:[%s0 + $0x30] sm:$0xf]
  %v52 = vld [vmem:[%s0 + $0x34] sm:$0xf]
  %v53 = vld [vmem:[%s0 + $0x38] sm:$0xf]
  %v54 = vld [vmem:[%s0 + $0x3c] sm:$0xf]
  %v55 = vld [vmem:[%s1] sm:$0xf]
  %v56 = vld [vmem:[%s1 + $0x4] sm:$0xf]
  %v57 = vld [vmem:[%s1 + $0x8] sm:$0xf]
  %v58 = vld [vmem:[%s1 + $0xc] sm:$0xf]
  %v59 = vld [vmem:[%s1 + $0x10] sm:$0xf]
  %v60 = vld [vmem:[%s1 + $0x14] sm:$0xf]
  %v61 = vld [vmem:[%s1 + $0x18] sm:$0xf]
  %v62 = vld [vmem:[%s1 + $0x1c] sm:$0xf]
  %v63 = vld [vmem:[%s2] sm:$0x1]
  %v65 = vlaneseq
  %v66 = vshrl.u32 %v65, 7
  %v67 = vsub.s32 0, %v66
  %v68 = vrot.slane %v63, %v67
  %v86 = vunpack.c.l.b16 %v39
  %v87 = vunpack.c.l.b16 %v40
  %v88 = vunpack.c.l.b16 %v41
  %v89 = vunpack.c.l.b16 %v42
  %v90 = vunpack.c.l.b16 %v43
  %v91 = vunpack.c.l.b16 %v44
  %v92 = vunpack.c.l.b16 %v45
  %v93 = vunpack.c.l.b16 %v46
  %v94 = vunpack.c.l.b16 %v47
  %v95 = vunpack.c.l.b16 %v48
  %v96 = vunpack.c.l.b16 %v49
  %v97 = vunpack.c.l.b16 %v50
  %v98 = vunpack.c.l.b16 %v51
  %v99 = vunpack.c.l.b16 %v52
  %v100 = vunpack.c.l.b16 %v53
  %v101 = vunpack.c.l.b16 %v54
  %v102 = vpack.c.b16 %v87, %v86
  %v103 = vpack.c.b16 %v89, %v88
  %v104 = vpack.c.b16 %v91, %v90
  %v105 = vpack.c.b16 %v93, %v92
  %v106 = vpack.c.b16 %v95, %v94
  %v107 = vpack.c.b16 %v97, %v96
  %v108 = vpack.c.b16 %v99, %v98
  %v109 = vpack.c.b16 %v101, %v100
  %v118 = vunpack.c.l.b16 %v55
  %v119 = vunpack.c.l.b16 %v56
  %v120 = vunpack.c.l.b16 %v57
  %v121 = vunpack.c.l.b16 %v58
  %v122 = vunpack.c.l.b16 %v59
  %v123 = vunpack.c.l.b16 %v60
  %v124 = vunpack.c.l.b16 %v61
  %v125 = vunpack.c.l.b16 %v62
  %v126 = vpack.c.b16 %v119, %v118
  %v127 = vpack.c.b16 %v121, %v120
  %v128 = vpack.c.b16 %v123, %v122
  %v129 = vpack.c.b16 %v125, %v124
  %vm134 = vcmask 523264
  %v136 = vsel %vm134, %v102, 0
  %v139 = vsel %vm134, %v103, 0
  %v142 = vsel %vm134, %v104, 0
  %v145 = vsel %vm134, %v105, 0
  %v148 = vsel %vm134, %v106, 0
  %v151 = vsel %vm134, %v107, 0
  %v154 = vsel %vm134, %v108, 0
  %v157 = vsel %vm134, %v109, 0
  %159 = vmatprep.subr.bf16.mxu0 0
  %160 = vmatpush1.bf16.msra.mxu0 %v126
  %161 = vmatprep.subr.bf16.mxu0 0
  %162 = vmatpush1.bf16.msra.mxu0 %v127
  %163 = vmatprep.subr.bf16.mxu0 0
  %164 = vmatpush1.bf16.msra.mxu0 %v128
  %165 = vmatprep.subr.bf16.mxu0 0
  %166 = vmatpush1.bf16.msra.mxu0 %v129
  %167 = vmatprep.subr.bf16.mxu0 0
  %168 = vmatpush1.bf16.msra.mxu0 0
  %169 = vmatprep.subr.bf16.mxu0 0
  %170 = vmatpush1.bf16.msra.mxu0 0
  %171 = vmatprep.subr.bf16.mxu0 0
  %172 = vmatpush1.bf16.msra.mxu0 0
  %173 = vmatprep.subr.bf16.mxu0 0
  %174 = vmatpush1.bf16.msra.mxu0 0
  %175 = vmatprep.subr.bf16.mxu0 0
  %176 = vmatpush1.bf16.msra.mxu0 0
  %177 = vmatprep.subr.bf16.mxu0 0
  %178 = vmatpush1.bf16.msra.mxu0 0
  %179 = vmatprep.subr.bf16.mxu0 0
  %180 = vmatpush1.bf16.msra.mxu0 0
  %181 = vmatprep.subr.bf16.mxu0 0
  %182 = vmatpush1.bf16.msra.mxu0 0
  %183 = vmatprep.subr.bf16.mxu0 0
  %184 = vmatpush1.bf16.msra.mxu0 0
  %185 = vmatprep.subr.bf16.mxu0 0
  %186 = vmatpush1.bf16.msra.mxu0 0
  %187 = vmatprep.subr.bf16.mxu0 0
  %188 = vmatpush1.bf16.msra.mxu0 0
  %189 = vmatprep.subr.bf16.mxu0 0
  %190 = vmatpush1.bf16.msra.mxu0 0
  %191 = vmatprep.mubr.bf16.mxu0 0
  %192 = vmatmul.mubr.bf16.gmra.mrb[0].mxu0 %v136
  %v193 = vpop.f32.mrb[0].mxu0
  %v194 = vadd.f32 %v68, %v193
  %v195 = vpop.f32.mrb[0].mxu0
  %v196 = vpop.f32.mrb[0].mxu0
  %v197 = vadd.f32 %v68, %v196
  %v198 = vpop.f32.mrb[0].mxu0
  %199 = vmatprep.mubr.bf16.mxu0 0
  %200 = vmatmul.mubr.bf16.gmra.mrb[0].mxu0 %v139
  %v201 = vpop.f32.mrb[0].mxu0
  %v202 = vadd.f32 %v68, %v201
  %v203 = vpop.f32.mrb[0].mxu0
  %v204 = vpop.f32.mrb[0].mxu0
  %v205 = vadd.f32 %v68, %v204
  %v206 = vpop.f32.mrb[0].mxu0
  %207 = vmatprep.mubr.bf16.mxu0 0
  %208 = vmatmul.mubr.bf16.gmra.mrb[0].mxu0 %v142
  %v209 = vpop.f32.mrb[0].mxu0
  %v210 = vadd.f32 %v68, %v209
  %v211 = vpop.f32.mrb[0].mxu0
  %v212 = vpop.f32.mrb[0].mxu0
  %v213 = vadd.f32 %v68, %v212
  %v214 = vpop.f32.mrb[0].mxu0
  %215 = vmatprep.mubr.bf16.mxu0 0
  %216 = vmatmul.mubr.bf16.gmra.mrb[0].mxu0 %v145
  %v217 = vpop.f32.mrb[0].mxu0
  %v218 = vadd.f32 %v68, %v217
  %v219 = vpop.f32.mrb[0].mxu0
  %v220 = vpop.f32.mrb[0].mxu0
  %v221 = vadd.f32 %v68, %v220
  %v222 = vpop.f32.mrb[0].mxu0
  %223 = vmatprep.mubr.bf16.mxu0 0
  %224 = vmatmul.mubr.bf16.gmra.mrb[0].mxu0 %v148
  %v225 = vpop.f32.mrb[0].mxu0
  %v226 = vadd.f32 %v68, %v225
  %v227 = vpop.f32.mrb[0].mxu0
  %v228 = vpop.f32.mrb[0].mxu0
  %v229 = vadd.f32 %v68, %v228
  %v230 = vpop.f32.mrb[0].mxu0
  %231 = vmatprep.mubr.bf16.mxu0 0
  %232 = vmatmul.mubr.bf16.gmra.mrb[0].mxu0 %v151
  %v233 = vpop.f32.mrb[0].mxu0
  %v234 = vadd.f32 %v68, %v233
  %v235 = vpop.f32.mrb[0].mxu0
  %v236 = vpop.f32.mrb[0].mxu0
  %v237 = vadd.f32 %v68, %v236
  %v238 = vpop.f32.mrb[0].mxu0
  %239 = vmatprep.mubr.bf16.mxu0 0
  %240 = vmatmul.mubr.bf16.gmra.mrb[0].mxu0 %v154
  %v241 = vpop.f32.mrb[0].mxu0
  %v242 = vadd.f32 %v68, %v241
  %v243 = vpop.f32.mrb[0].mxu0
  %v244 = vpop.f32.mrb[0].mxu0
  %v245 = vadd.f32 %v68, %v244
  %v246 = vpop.f32.mrb[0].mxu0
  %247 = vmatprep.mubr.bf16.mxu0 0
  %248 = vmatmul.mubr.bf16.gmra.mrb[0].mxu0 %v157
  %v249 = vpop.f32.mrb[0].mxu0
  %v250 = vadd.f32 %v68, %v249
  %v251 = vpop.f32.mrb[0].mxu0
  %v252 = vpop.f32.mrb[0].mxu0
  %v253 = vadd.f32 %v68, %v252
  %v254 = vpop.f32.mrb[0].mxu0
  %255 = vdwg.mxu0
  %v256 = vmax.f32 %v194, 0.0
  %v257 = vmax.f32 %v197, 0.0
  %v258 = vmax.f32 %v202, 0.0
  %v259 = vmax.f32 %v205, 0.0
  %v260 = vmax.f32 %v210, 0.0
  %v261 = vmax.f32 %v213, 0.0
  %v262 = vmax.f32 %v218, 0.0
  %v263 = vmax.f32 %v221, 0.0
  %v264 = vmax.f32 %v226, 0.0
  %v265 = vmax.f32 %v229, 0.0
  %v266 = vmax.f32 %v234, 0.0
  %v267 = vmax.f32 %v237, 0.0
  %v268 = vmax.f32 %v242, 0.0
  %v269 = vmax.f32 %v245, 0.0
  %v270 = vmax.f32 %v250, 0.0
  %v271 = vmax.f32 %v253, 0.0
  %v272 = vpack.c.bf16 %v257, %v256
  %v273 = vpack.c.bf16 %v259, %v258
  %v274 = vpack.c.bf16 %v261, %v260
  %v275 = vpack.c.bf16 %v263, %v262
  %v276 = vpack.c.bf16 %v265, %v264
  %v277 = vpack.c.bf16 %v267, %v266
  %v278 = vpack.c.bf16 %v269, %v268
  %v279 = vpack.c.bf16 %v271, %v270
  %v280 = vld [vmem:[%s3] sm:$0xf]
  %v281 = vld [vmem:[%s3 + $0x4] sm:$0xf]
  %v282 = vld [vmem:[%s3 + $0x8] sm:$0xf]
  %v283 = vld [vmem:[%s3 + $0xc] sm:$0xf]
  %v284 = vld [vmem:[%s3 + $0x10] sm:$0xf]
  %v285 = vld [vmem:[%s3 + $0x14] sm:$0xf]
  %v286 = vld [vmem:[%s3 + $0x18] sm:$0xf]
  %v287 = vld [vmem:[%s3 + $0x1c] sm:$0xf]
  %v288 = vld [vmem:[%s4] sm:$0x1]
  %v290 = vlaneseq
  %v291 = vshrl.u32 %v290, 7
  %v292 = vsub.s32 0, %v291
  %v293 = vrot.slane %v288, %v292
  %v303 = vunpack.c.l.b16 %v280
  %v304 = vunpack.c.l.b16 %v281
  %v305 = vunpack.c.l.b16 %v282
  %v306 = vunpack.c.l.b16 %v283
  %v307 = vunpack.c.l.b16 %v284
  %v308 = vunpack.c.l.b16 %v285
  %v309 = vunpack.c.l.b16 %v286
  %v310 = vunpack.c.l.b16 %v287
  %v311 = vpack.c.b16 %v304, %v303
  %v312 = vpack.c.b16 %v306, %v305
  %v313 = vpack.c.b16 %v308, %v307
  %v314 = vpack.c.b16 %v310, %v309
  %v320 = vsel %vm134, %v272, 0
  %v323 = vsel %vm134, %v273, 0
  %v326 = vsel %vm134, %v274, 0
  %v329 = vsel %vm134, %v275, 0
  %v332 = vsel %vm134, %v276, 0
  %v335 = vsel %vm134, %v277, 0
  %v338 = vsel %vm134, %v278, 0
  %v341 = vsel %vm134, %v279, 0
  %343 = vmatprep.subr.bf16.mxu0 0
  %344 = vmatpush1.bf16.msra.mxu0 %v311
  %345 = vmatprep.subr.bf16.mxu0 0
  %346 = vmatpush1.bf16.msra.mxu0 %v312
  %347 = vmatprep.subr.bf16.mxu0 0
  %348 = vmatpush1.bf16.msra.mxu0 %v313
  %349 = vmatprep.subr.bf16.mxu0 0
  %350 = vmatpush1.bf16.msra.mxu0 %v314
  %351 = vmatprep.subr.bf16.mxu0 0
  %352 = vmatpush1.bf16.msra.mxu0 0
  %353 = vmatprep.subr.bf16.mxu0 0
  %354 = vmatpush1.bf16.msra.mxu0 0
  %355 = vmatprep.subr.bf16.mxu0 0
  %356 = vmatpush1.bf16.msra.mxu0 0
  %357 = vmatprep.subr.bf16.mxu0 0
  %358 = vmatpush1.bf16.msra.mxu0 0
  %359 = vmatprep.subr.bf16.mxu0 0
  %360 = vmatpush1.bf16.msra.mxu0 0
  %361 = vmatprep.subr.bf16.mxu0 0
  %362 = vmatpush1.bf16.msra.mxu0 0
  %363 = vmatprep.subr.bf16.mxu0 0
  %364 = vmatpush1.bf16.msra.mxu0 0
  %365 = vmatprep.subr.bf16.mxu0 0
  %366 = vmatpush1.bf16.msra.mxu0 0
  %367 = vmatprep.subr.bf16.mxu0 0
  %368 = vmatpush1.bf16.msra.mxu0 0
  %369 = vmatprep.subr.bf16.mxu0 0
  %370 = vmatpush1.bf16.msra.mxu0 0
  %371 = vmatprep.subr.bf16.mxu0 0
  %372 = vmatpush1.bf16.msra.mxu0 0
  %373 = vmatprep.subr.bf16.mxu0 0
  %374 = vmatpush1.bf16.msra.mxu0 0
  %375 = vmatprep.mubr.bf16.mxu0 0
  %376 = vmatmul.mubr.bf16.gmra.mrb[0].mxu0 %v320
  %v377 = vpop.f32.mrb[0].mxu0
  %v378 = vadd.f32 %v293, %v377
  %v379 = vpop.f32.mrb[0].mxu0
  %v380 = vpop.f32.mrb[0].mxu0
  %v381 = vadd.f32 %v293, %v380
  %v382 = vpop.f32.mrb[0].mxu0
  %383 = vmatprep.mubr.bf16.mxu0 0
  %384 = vmatmul.mubr.bf16.gmra.mrb[0].mxu0 %v323
  %v385 = vpop.f32.mrb[0].mxu0
  %v386 = vadd.f32 %v293, %v385
  %v387 = vpop.f32.mrb[0].mxu0
  %v388 = vpop.f32.mrb[0].mxu0
  %v389 = vadd.f32 %v293, %v388
  %v390 = vpop.f32.mrb[0].mxu0
  %391 = vmatprep.mubr.bf16.mxu0 0
  %392 = vmatmul.mubr.bf16.gmra.mrb[0].mxu0 %v326
  %v393 = vpop.f32.mrb[0].mxu0
  %v394 = vadd.f32 %v293, %v393
  %v395 = vpop.f32.mrb[0].mxu0
  %v396 = vpop.f32.mrb[0].mxu0
  %v397 = vadd.f32 %v293, %v396
  %v398 = vpop.f32.mrb[0].mxu0
  %399 = vmatprep.mubr.bf16.mxu0 0
  %400 = vmatmul.mubr.bf16.gmra.mrb[0].mxu0 %v329
  %v401 = vpop.f32.mrb[0].mxu0
  %v402 = vadd.f32 %v293, %v401
  %v403 = vpop.f32.mrb[0].mxu0
  %v404 = vpop.f32.mrb[0].mxu0
  %v405 = vadd.f32 %v293, %v404
  %v406 = vpop.f32.mrb[0].mxu0
  %407 = vmatprep.mubr.bf16.mxu0 0
  %408 = vmatmul.mubr.bf16.gmra.mrb[0].mxu0 %v332
  %v409 = vpop.f32.mrb[0].mxu0
  %v410 = vadd.f32 %v293, %v409
  %v411 = vpop.f32.mrb[0].mxu0
  %v412 = vpop.f32.mrb[0].mxu0
  %v413 = vadd.f32 %v293, %v412
  %v414 = vpop.f32.mrb[0].mxu0
  %415 = vmatprep.mubr.bf16.mxu0 0
  %416 = vmatmul.mubr.bf16.gmra.mrb[0].mxu0 %v335
  %v417 = vpop.f32.mrb[0].mxu0
  %v418 = vadd.f32 %v293, %v417
  %v419 = vpop.f32.mrb[0].mxu0
  %v420 = vpop.f32.mrb[0].mxu0
  %v421 = vadd.f32 %v293, %v420
  %v422 = vpop.f32.mrb[0].mxu0
  %423 = vmatprep.mubr.bf16.mxu0 0
  %424 = vmatmul.mubr.bf16.gmra.mrb[0].mxu0 %v338
  %v425 = vpop.f32.mrb[0].mxu0
  %v426 = vadd.f32 %v293, %v425
  %v427 = vpop.f32.mrb[0].mxu0
  %v428 = vpop.f32.mrb[0].mxu0
  %v429 = vadd.f32 %v293, %v428
  %v430 = vpop.f32.mrb[0].mxu0
  %431 = vmatprep.mubr.bf16.mxu0 0
  %432 = vmatmul.mubr.bf16.gmra.mrb[0].mxu0 %v341
  %v433 = vpop.f32.mrb[0].mxu0
  %v434 = vadd.f32 %v293, %v433
  %v435 = vpop.f32.mrb[0].mxu0
  %v436 = vpop.f32.mrb[0].mxu0
  %v437 = vadd.f32 %v293, %v436
  %v438 = vpop.f32.mrb[0].mxu0
  %439 = vdwg.mxu0
  %v440 = vmax.f32 %v378, 0.0
  %v441 = vmax.f32 %v381, 0.0
  %v442 = vmax.f32 %v386, 0.0
  %v443 = vmax.f32 %v389, 0.0
  %v444 = vmax.f32 %v394, 0.0
  %v445 = vmax.f32 %v397, 0.0
  %v446 = vmax.f32 %v402, 0.0
  %v447 = vmax.f32 %v405, 0.0
  %v448 = vmax.f32 %v410, 0.0
  %v449 = vmax.f32 %v413, 0.0
  %v450 = vmax.f32 %v418, 0.0
  %v451 = vmax.f32 %v421, 0.0
  %v452 = vmax.f32 %v426, 0.0
  %v453 = vmax.f32 %v429, 0.0
  %v454 = vmax.f32 %v434, 0.0
  %v455 = vmax.f32 %v437, 0.0
  %v456 = vpack.c.bf16 %v441, %v440
  %v457 = vpack.c.bf16 %v443, %v442
  %v458 = vpack.c.bf16 %v445, %v444
  %v459 = vpack.c.bf16 %v447, %v446
  %v460 = vpack.c.bf16 %v449, %v448
  %v461 = vpack.c.bf16 %v451, %v450
  %v462 = vpack.c.bf16 %v453, %v452
  %v463 = vpack.c.bf16 %v455, %v454
  %v464 = vld [vmem:[%s5] sm:$0xff]
  %v465 = vld [vmem:[%s5 + $0x8] sm:$0xff]
  %v466 = vld [vmem:[%s5 + $0x10] sm:$0xff]
  %v467 = vld [vmem:[%s5 + $0x18] sm:$0xff]
  %v468 = vld [vmem:[%s5 + $0x20] sm:$0xff]
  %v469 = vld [vmem:[%s5 + $0x28] sm:$0xff]
  %v470 = vld [vmem:[%s5 + $0x30] sm:$0xff]
  %v471 = vld [vmem:[%s5 + $0x38] sm:$0xff]
  %v472 = vld [vmem:[%s5 + $0x40] sm:$0xff]
  %v473 = vld [vmem:[%s5 + $0x48] sm:$0xff]
  %v474 = vld [vmem:[%s5 + $0x50] sm:$0xff]
  %v475 = vld [vmem:[%s5 + $0x58] sm:$0xff]
  %v476 = vld [vmem:[%s5 + $0x60] sm:$0xff]
  %v477 = vld [vmem:[%s5 + $0x68] sm:$0xff]
  %v478 = vld [vmem:[%s5 + $0x70] sm:$0xff]
  %v479 = vld [vmem:[%s5 + $0x78] sm:$0xff]
  %v480 = vld [vmem:[%s6] sm:$0x3]
  %v482 = vlaneseq
  %v483 = vshrl.u32 %v482, 7
  %v484 = vsub.s32 0, %v483
  %v485 = vrot.slane %v480, %v484
  %v486 = vlaneseq
  %v487 = vshrl.u32 %v486, 7
  %v488 = vsub.s32 1, %v487
  %v489 = vrot.slane %v480, %v488
  %v508 = vunpack.c.l.b16 %v464
  %v509 = vunpack.c.h.b16 %v464
  %v510 = vunpack.c.l.b16 %v465
  %v511 = vunpack.c.h.b16 %v465
  %v512 = vunpack.c.l.b16 %v466
  %v513 = vunpack.c.h.b16 %v466
  %v514 = vunpack.c.l.b16 %v467
  %v515 = vunpack.c.h.b16 %v467
  %v516 = vunpack.c.l.b16 %v468
  %v517 = vunpack.c.h.b16 %v468
  %v518 = vunpack.c.l.b16 %v469
  %v519 = vunpack.c.h.b16 %v469
  %v520 = vunpack.c.l.b16 %v470
  %v521 = vunpack.c.h.b16 %v470
  %v522 = vunpack.c.l.b16 %v471
  %v523 = vunpack.c.h.b16 %v471
  %v524 = vunpack.c.l.b16 %v472
  %v525 = vunpack.c.h.b16 %v472
  %v526 = vunpack.c.l.b16 %v473
  %v527 = vunpack.c.h.b16 %v473
  %v528 = vunpack.c.l.b16 %v474
  %v529 = vunpack.c.h.b16 %v474
  %v530 = vunpack.c.l.b16 %v475
  %v531 = vunpack.c.h.b16 %v475
  %v532 = vunpack.c.l.b16 %v476
  %v533 = vunpack.c.h.b16 %v476
  %v534 = vunpack.c.l.b16 %v477
  %v535 = vunpack.c.h.b16 %v477
  %v536 = vunpack.c.l.b16 %v478
  %v537 = vunpack.c.h.b16 %v478
  %v538 = vunpack.c.l.b16 %v479
  %v539 = vunpack.c.h.b16 %v479
  %v540 = vpack.c.b16 %v510, %v508
  %v541 = vpack.c.b16 %v511, %v509
  %v542 = vpack.c.b16 %v514, %v512
  %v543 = vpack.c.b16 %v515, %v513
  %v544 = vpack.c.b16 %v518, %v516
  %v545 = vpack.c.b16 %v519, %v517
  %v546 = vpack.c.b16 %v522, %v520
  %v547 = vpack.c.b16 %v523, %v521
  %v548 = vpack.c.b16 %v526, %v524
  %v549 = vpack.c.b16 %v527, %v525
  %v550 = vpack.c.b16 %v530, %v528
  %v551 = vpack.c.b16 %v531, %v529
  %v552 = vpack.c.b16 %v534, %v532
  %v553 = vpack.c.b16 %v535, %v533
  %v554 = vpack.c.b16 %v538, %v536
  %v555 = vpack.c.b16 %v539, %v537
  %572 = vmatprep.subr.bf16.mxu0 %v541
  %573 = vmatpush1.bf16.msra.mxu0 %v540
  %574 = vmatprep.subr.bf16.mxu0 %v543
  %575 = vmatpush1.bf16.msra.mxu0 %v542
  %576 = vmatprep.subr.bf16.mxu0 %v545
  %577 = vmatpush1.bf16.msra.mxu0 %v544
  %578 = vmatprep.subr.bf16.mxu0 %v547
  %579 = vmatpush1.bf16.msra.mxu0 %v546
  %580 = vmatprep.subr.bf16.mxu0 %v549
  %581 = vmatpush1.bf16.msra.mxu0 %v548
  %582 = vmatprep.subr.bf16.mxu0 %v551
  %583 = vmatpush1.bf16.msra.mxu0 %v550
  %584 = vmatprep.subr.bf16.mxu0 %v553
  %585 = vmatpush1.bf16.msra.mxu0 %v552
  %586 = vmatprep.subr.bf16.mxu0 %v555
  %587 = vmatpush1.bf16.msra.mxu0 %v554
  %588 = vmatprep.subr.bf16.mxu0 0
  %589 = vmatpush1.bf16.msra.mxu0 0
  %590 = vmatprep.subr.bf16.mxu0 0
  %591 = vmatpush1.bf16.msra.mxu0 0
  %592 = vmatprep.subr.bf16.mxu0 0
  %593 = vmatpush1.bf16.msra.mxu0 0
  %594 = vmatprep.subr.bf16.mxu0 0
  %595 = vmatpush1.bf16.msra.mxu0 0
  %596 = vmatprep.subr.bf16.mxu0 0
  %597 = vmatpush1.bf16.msra.mxu0 0
  %598 = vmatprep.subr.bf16.mxu0 0
  %599 = vmatpush1.bf16.msra.mxu0 0
  %600 = vmatprep.subr.bf16.mxu0 0
  %601 = vmatpush1.bf16.msra.mxu0 0
  %602 = vmatprep.subr.bf16.mxu0 0
  %603 = vmatpush1.bf16.msra.mxu0 0
  %604 = vmatprep.mubr.bf16.mxu0 0
  %605 = vmatmul.mubr.bf16.gmra.mrb[0].mxu0 %v456
  %v606 = vpop.f32.mrb[0].mxu0
  %v607 = vadd.f32 %v485, %v606
  %v608 = vpop.f32.mrb[0].mxu0
  %v609 = vadd.f32 %v489, %v608
  %v610 = vpop.f32.mrb[0].mxu0
  %v611 = vadd.f32 %v485, %v610
  %v612 = vpop.f32.mrb[0].mxu0
  %v613 = vadd.f32 %v489, %v612
  %614 = vmatprep.mubr.bf16.mxu0 0
  %615 = vmatmul.mubr.bf16.gmra.mrb[0].mxu0 %v457
  %v616 = vpop.f32.mrb[0].mxu0
  %v617 = vadd.f32 %v485, %v616
  %v618 = vpop.f32.mrb[0].mxu0
  %v619 = vadd.f32 %v489, %v618
  %v620 = vpop.f32.mrb[0].mxu0
  %v621 = vadd.f32 %v485, %v620
  %v622 = vpop.f32.mrb[0].mxu0
  %v623 = vadd.f32 %v489, %v622
  %624 = vmatprep.mubr.bf16.mxu0 0
  %625 = vmatmul.mubr.bf16.gmra.mrb[0].mxu0 %v458
  %v626 = vpop.f32.mrb[0].mxu0
  %v627 = vadd.f32 %v485, %v626
  %v628 = vpop.f32.mrb[0].mxu0
  %v629 = vadd.f32 %v489, %v628
  %v630 = vpop.f32.mrb[0].mxu0
  %v631 = vadd.f32 %v485, %v630
  %v632 = vpop.f32.mrb[0].mxu0
  %v633 = vadd.f32 %v489, %v632
  %634 = vmatprep.mubr.bf16.mxu0 0
  %635 = vmatmul.mubr.bf16.gmra.mrb[0].mxu0 %v459
  %v636 = vpop.f32.mrb[0].mxu0
  %v637 = vadd.f32 %v485, %v636
  %v638 = vpop.f32.mrb[0].mxu0
  %v639 = vadd.f32 %v489, %v638
  %v640 = vpop.f32.mrb[0].mxu0
  %v641 = vadd.f32 %v485, %v640
  %v642 = vpop.f32.mrb[0].mxu0
  %v643 = vadd.f32 %v489, %v642
  %644 = vmatprep.mubr.bf16.mxu0 0
  %645 = vmatmul.mubr.bf16.gmra.mrb[0].mxu0 %v460
  %v646 = vpop.f32.mrb[0].mxu0
  %v647 = vadd.f32 %v485, %v646
  %v648 = vpop.f32.mrb[0].mxu0
  %v649 = vadd.f32 %v489, %v648
  %v650 = vpop.f32.mrb[0].mxu0
  %v651 = vadd.f32 %v485, %v650
  %v652 = vpop.f32.mrb[0].mxu0
  %v653 = vadd.f32 %v489, %v652
  %654 = vmatprep.mubr.bf16.mxu0 0
  %655 = vmatmul.mubr.bf16.gmra.mrb[0].mxu0 %v461
  %v656 = vpop.f32.mrb[0].mxu0
  %v657 = vadd.f32 %v485, %v656
  %v658 = vpop.f32.mrb[0].mxu0
  %v659 = vadd.f32 %v489, %v658
  %v660 = vpop.f32.mrb[0].mxu0
  %v661 = vadd.f32 %v485, %v660
  %v662 = vpop.f32.mrb[0].mxu0
  %v663 = vadd.f32 %v489, %v662
  %664 = vmatprep.mubr.bf16.mxu0 0
  %665 = vmatmul.mubr.bf16.gmra.mrb[0].mxu0 %v462
  %v666 = vpop.f32.mrb[0].mxu0
  %v667 = vadd.f32 %v485, %v666
  %v668 = vpop.f32.mrb[0].mxu0
  %v669 = vadd.f32 %v489, %v668
  %v670 = vpop.f32.mrb[0].mxu0
  %v671 = vadd.f32 %v485, %v670
  %v672 = vpop.f32.mrb[0].mxu0
  %v673 = vadd.f32 %v489, %v672
  %674 = vmatprep.mubr.bf16.mxu0 0
  %675 = vmatmul.mubr.bf16.gmra.mrb[0].mxu0 %v463
  %v676 = vpop.f32.mrb[0].mxu0
  %v677 = vadd.f32 %v485, %v676
  %v678 = vpop.f32.mrb[0].mxu0
  %v679 = vadd.f32 %v489, %v678
  %v680 = vpop.f32.mrb[0].mxu0
  %v681 = vadd.f32 %v485, %v680
  %v682 = vpop.f32.mrb[0].mxu0
  %v683 = vadd.f32 %v489, %v682
  %684 = vdwg.mxu0
  %v685 = vmax.f32 %v607, 0.0
  %v686 = vmax.f32 %v609, 0.0
  %v687 = vmax.f32 %v611, 0.0
  %v688 = vmax.f32 %v613, 0.0
  %v689 = vmax.f32 %v617, 0.0
  %v690 = vmax.f32 %v619, 0.0
  %v691 = vmax.f32 %v621, 0.0
  %v692 = vmax.f32 %v623, 0.0
  %v693 = vmax.f32 %v627, 0.0
  %v694 = vmax.f32 %v629, 0.0
  %v695 = vmax.f32 %v631, 0.0
  %v696 = vmax.f32 %v633, 0.0
  %v697 = vmax.f32 %v637, 0.0
  %v698 = vmax.f32 %v639, 0.0
  %v699 = vmax.f32 %v641, 0.0
  %v700 = vmax.f32 %v643, 0.0
  %v701 = vmax.f32 %v647, 0.0
  %v702 = vmax.f32 %v649, 0.0
  %v703 = vmax.f32 %v651, 0.0
  %v704 = vmax.f32 %v653, 0.0
  %v705 = vmax.f32 %v657, 0.0
  %v706 = vmax.f32 %v659, 0.0
  %v707 = vmax.f32 %v661, 0.0
  %v708 = vmax.f32 %v663, 0.0
  %v709 = vmax.f32 %v667, 0.0
  %v710 = vmax.f32 %v669, 0.0
  %v711 = vmax.f32 %v671, 0.0
  %v712 = vmax.f32 %v673, 0.0
  %v713 = vmax.f32 %v677, 0.0
  %v714 = vmax.f32 %v679, 0.0
  %v715 = vmax.f32 %v681, 0.0
  %v716 = vmax.f32 %v683, 0.0
  %v717 = vpack.c.bf16 %v687, %v685
  %v718 = vpack.c.bf16 %v688, %v686
  %v719 = vpack.c.bf16 %v691, %v689
  %v720 = vpack.c.bf16 %v692, %v690
  %v721 = vpack.c.bf16 %v695, %v693
  %v722 = vpack.c.bf16 %v696, %v694
  %v723 = vpack.c.bf16 %v699, %v697
  %v724 = vpack.c.bf16 %v700, %v698
  %v725 = vpack.c.bf16 %v703, %v701
  %v726 = vpack.c.bf16 %v704, %v702
  %v727 = vpack.c.bf16 %v707, %v705
  %v728 = vpack.c.bf16 %v708, %v706
  %v729 = vpack.c.bf16 %v711, %v709
  %v730 = vpack.c.bf16 %v712, %v710
  %v731 = vpack.c.bf16 %v715, %v713
  %v732 = vpack.c.bf16 %v716, %v714
  %v733 = vld [vmem:[%s7] sm:$0xf]
  %v734 = vld [vmem:[%s7 + $0x4] sm:$0xf]
  %v735 = vld [vmem:[%s7 + $0x8] sm:$0xf]
  %v736 = vld [vmem:[%s7 + $0xc] sm:$0xf]
  %v737 = vld [vmem:[%s7 + $0x10] sm:$0xf]
  %v738 = vld [vmem:[%s7 + $0x14] sm:$0xf]
  %v739 = vld [vmem:[%s7 + $0x18] sm:$0xf]
  %v740 = vld [vmem:[%s7 + $0x1c] sm:$0xf]
  %v741 = vld [vmem:[%s7 + $0x20] sm:$0xf]
  %v742 = vld [vmem:[%s7 + $0x24] sm:$0xf]
  %v743 = vld [vmem:[%s7 + $0x28] sm:$0xf]
  %v744 = vld [vmem:[%s7 + $0x2c] sm:$0xf]
  %v745 = vld [vmem:[%s7 + $0x30] sm:$0xf]
  %v746 = vld [vmem:[%s7 + $0x34] sm:$0xf]
  %v747 = vld [vmem:[%s7 + $0x38] sm:$0xf]
  %v748 = vld [vmem:[%s7 + $0x3c] sm:$0xf]
  %v749 = vld [vmem:[%s7 + $0x40] sm:$0xf]
  %v750 = vld [vmem:[%s7 + $0x44] sm:$0xf]
  %v751 = vld [vmem:[%s7 + $0x48] sm:$0xf]
  %v752 = vld [vmem:[%s7 + $0x4c] sm:$0xf]
  %v753 = vld [vmem:[%s7 + $0x50] sm:$0xf]
  %v754 = vld [vmem:[%s7 + $0x54] sm:$0xf]
  %v755 = vld [vmem:[%s7 + $0x58] sm:$0xf]
  %v756 = vld [vmem:[%s7 + $0x5c] sm:$0xf]
  %v757 = vld [vmem:[%s7 + $0x60] sm:$0xf]
  %v758 = vld [vmem:[%s7 + $0x64] sm:$0xf]
  %v759 = vld [vmem:[%s7 + $0x68] sm:$0xf]
  %v760 = vld [vmem:[%s7 + $0x6c] sm:$0xf]
  %v761 = vld [vmem:[%s7 + $0x70] sm:$0xf]
  %v762 = vld [vmem:[%s7 + $0x74] sm:$0xf]
  %v763 = vld [vmem:[%s7 + $0x78] sm:$0xf]
  %v764 = vld [vmem:[%s7 + $0x7c] sm:$0xf]
  %v765 = vld [vmem:[%s8] sm:$0x1]
  %v767 = vlaneseq
  %v768 = vshrl.u32 %v767, 7
  %v769 = vsub.s32 0, %v768
  %v770 = vrot.slane %v765, %v769
  %v804 = vunpack.c.l.b16 %v733
  %v805 = vunpack.c.l.b16 %v734
  %v806 = vunpack.c.l.b16 %v735
  %v807 = vunpack.c.l.b16 %v736
  %v808 = vunpack.c.l.b16 %v737
  %v809 = vunpack.c.l.b16 %v738
  %v810 = vunpack.c.l.b16 %v739
  %v811 = vunpack.c.l.b16 %v740
  %v812 = vunpack.c.l.b16 %v741
  %v813 = vunpack.c.l.b16 %v742
  %v814 = vunpack.c.l.b16 %v743
  %v815 = vunpack.c.l.b16 %v744
  %v816 = vunpack.c.l.b16 %v745
  %v817 = vunpack.c.l.b16 %v746
  %v818 = vunpack.c.l.b16 %v747
  %v819 = vunpack.c.l.b16 %v748
  %v820 = vunpack.c.l.b16 %v749
  %v821 = vunpack.c.l.b16 %v750
  %v822 = vunpack.c.l.b16 %v751
  %v823 = vunpack.c.l.b16 %v752
  %v824 = vunpack.c.l.b16 %v753
  %v825 = vunpack.c.l.b16 %v754
  %v826 = vunpack.c.l.b16 %v755
  %v827 = vunpack.c.l.b16 %v756
  %v828 = vunpack.c.l.b16 %v757
  %v829 = vunpack.c.l.b16 %v758
  %v830 = vunpack.c.l.b16 %v759
  %v831 = vunpack.c.l.b16 %v760
  %v832 = vunpack.c.l.b16 %v761
  %v833 = vunpack.c.l.b16 %v762
  %v834 = vunpack.c.l.b16 %v763
  %v835 = vunpack.c.l.b16 %v764
  %v836 = vpack.c.b16 %v805, %v804
  %v837 = vpack.c.b16 %v807, %v806
  %v838 = vpack.c.b16 %v809, %v808
  %v839 = vpack.c.b16 %v811, %v810
  %v840 = vpack.c.b16 %v813, %v812
  %v841 = vpack.c.b16 %v815, %v814
  %v842 = vpack.c.b16 %v817, %v816
  %v843 = vpack.c.b16 %v819, %v818
  %v844 = vpack.c.b16 %v821, %v820
  %v845 = vpack.c.b16 %v823, %v822
  %v846 = vpack.c.b16 %v825, %v824
  %v847 = vpack.c.b16 %v827, %v826
  %v848 = vpack.c.b16 %v829, %v828
  %v849 = vpack.c.b16 %v831, %v830
  %v850 = vpack.c.b16 %v833, %v832
  %v851 = vpack.c.b16 %v835, %v834
  %868 = vmatprep.subr.bf16.mxu0 0
  %869 = vmatpush1.bf16.msra.mxu0 %v836
  %870 = vmatprep.subr.bf16.mxu0 0
  %871 = vmatpush1.bf16.msra.mxu0 %v837
  %872 = vmatprep.subr.bf16.mxu0 0
  %873 = vmatpush1.bf16.msra.mxu0 %v838
  %874 = vmatprep.subr.bf16.mxu0 0
  %875 = vmatpush1.bf16.msra.mxu0 %v839
  %876 = vmatprep.subr.bf16.mxu0 0
  %877 = vmatpush1.bf16.msra.mxu0 %v840
  %878 = vmatprep.subr.bf16.mxu0 0
  %879 = vmatpush1.bf16.msra.mxu0 %v841
  %880 = vmatprep.subr.bf16.mxu0 0
  %881 = vmatpush1.bf16.msra.mxu0 %v842
  %882 = vmatprep.subr.bf16.mxu0 0
  %883 = vmatpush1.bf16.msra.mxu0 %v843
  %884 = vmatprep.subr.bf16.mxu0 0
  %885 = vmatpush1.bf16.msra.mxu0 %v844
  %886 = vmatprep.subr.bf16.mxu0 0
  %887 = vmatpush1.bf16.msra.mxu0 %v845
  %888 = vmatprep.subr.bf16.mxu0 0
  %889 = vmatpush1.bf16.msra.mxu0 %v846
  %890 = vmatprep.subr.bf16.mxu0 0
  %891 = vmatpush1.bf16.msra.mxu0 %v847
  %892 = vmatprep.subr.bf16.mxu0 0
  %893 = vmatpush1.bf16.msra.mxu0 %v848
  %894 = vmatprep.subr.bf16.mxu0 0
  %895 = vmatpush1.bf16.msra.mxu0 %v849
  %896 = vmatprep.subr.bf16.mxu0 0
  %897 = vmatpush1.bf16.msra.mxu0 %v850
  %898 = vmatprep.subr.bf16.mxu0 0
  %899 = vmatpush1.bf16.msra.mxu0 %v851
  %900 = vmatprep.mubr.bf16.mxu0 %v718
  %901 = vmatmul.mubr.bf16.gmra.mrb[0].mxu0 %v717
  %v902 = vpop.f32.mrb[0].mxu0
  %v903 = vadd.f32 %v770, %v902
  %v904 = vpop.f32.mrb[0].mxu0
  %v905 = vpop.f32.mrb[0].mxu0
  %v906 = vadd.f32 %v770, %v905
  %v907 = vpop.f32.mrb[0].mxu0
  %908 = vmatprep.mubr.bf16.mxu0 %v720
  %909 = vmatmul.mubr.bf16.gmra.mrb[0].mxu0 %v719
  %v910 = vpop.f32.mrb[0].mxu0
  %v911 = vadd.f32 %v770, %v910
  %v912 = vpop.f32.mrb[0].mxu0
  %v913 = vpop.f32.mrb[0].mxu0
  %v914 = vadd.f32 %v770, %v913
  %v915 = vpop.f32.mrb[0].mxu0
  %916 = vmatprep.mubr.bf16.mxu0 %v722
  %917 = vmatmul.mubr.bf16.gmra.mrb[0].mxu0 %v721
  %v918 = vpop.f32.mrb[0].mxu0
  %v919 = vadd.f32 %v770, %v918
  %v920 = vpop.f32.mrb[0].mxu0
  %v921 = vpop.f32.mrb[0].mxu0
  %v922 = vadd.f32 %v770, %v921
  %v923 = vpop.f32.mrb[0].mxu0
  %924 = vmatprep.mubr.bf16.mxu0 %v724
  %925 = vmatmul.mubr.bf16.gmra.mrb[0].mxu0 %v723
  %v926 = vpop.f32.mrb[0].mxu0
  %v927 = vadd.f32 %v770, %v926
  %v928 = vpop.f32.mrb[0].mxu0
  %v929 = vpop.f32.mrb[0].mxu0
  %v930 = vadd.f32 %v770, %v929
  %v931 = vpop.f32.mrb[0].mxu0
  %932 = vmatprep.mubr.bf16.mxu0 %v726
  %933 = vmatmul.mubr.bf16.gmra.mrb[0].mxu0 %v725
  %v934 = vpop.f32.mrb[0].mxu0
  %v935 = vadd.f32 %v770, %v934
  %v936 = vpop.f32.mrb[0].mxu0
  %v937 = vpop.f32.mrb[0].mxu0
  %v938 = vadd.f32 %v770, %v937
  %v939 = vpop.f32.mrb[0].mxu0
  %940 = vmatprep.mubr.bf16.mxu0 %v728
  %941 = vmatmul.mubr.bf16.gmra.mrb[0].mxu0 %v727
  %v942 = vpop.f32.mrb[0].mxu0
  %v943 = vadd.f32 %v770, %v942
  %v944 = vpop.f32.mrb[0].mxu0
  %v945 = vpop.f32.mrb[0].mxu0
  %v946 = vadd.f32 %v770, %v945
  %v947 = vpop.f32.mrb[0].mxu0
  %948 = vmatprep.mubr.bf16.mxu0 %v730
  %949 = vmatmul.mubr.bf16.gmra.mrb[0].mxu0 %v729
  %v950 = vpop.f32.mrb[0].mxu0
  %v951 = vadd.f32 %v770, %v950
  %v952 = vpop.f32.mrb[0].mxu0
  %v953 = vpop.f32.mrb[0].mxu0
  %v954 = vadd.f32 %v770, %v953
  %v955 = vpop.f32.mrb[0].mxu0
  %956 = vmatprep.mubr.bf16.mxu0 %v732
  %957 = vmatmul.mubr.bf16.gmra.mrb[0].mxu0 %v731
  %v958 = vpop.f32.mrb[0].mxu0
  %v959 = vadd.f32 %v770, %v958
  %v960 = vpop.f32.mrb[0].mxu0
  %v961 = vpop.f32.mrb[0].mxu0
  %v962 = vadd.f32 %v770, %v961
  %v963 = vpop.f32.mrb[0].mxu0
  %964 = vdwg.mxu0
  %v965 = vmax.f32 %v903, 0.0
  %v966 = vmax.f32 %v906, 0.0
  %v967 = vmax.f32 %v911, 0.0
  %v968 = vmax.f32 %v914, 0.0
  %v969 = vmax.f32 %v919, 0.0
  %v970 = vmax.f32 %v922, 0.0
  %v971 = vmax.f32 %v927, 0.0
  %v972 = vmax.f32 %v930, 0.0
  %v973 = vmax.f32 %v935, 0.0
  %v974 = vmax.f32 %v938, 0.0
  %v975 = vmax.f32 %v943, 0.0
  %v976 = vmax.f32 %v946, 0.0
  %v977 = vmax.f32 %v951, 0.0
  %v978 = vmax.f32 %v954, 0.0
  %v979 = vmax.f32 %v959, 0.0
  %v980 = vmax.f32 %v962, 0.0
  %v981 = vpack.c.bf16 %v966, %v965
  %v982 = vpack.c.bf16 %v968, %v967
  %v983 = vpack.c.bf16 %v970, %v969
  %v984 = vpack.c.bf16 %v972, %v971
  %v985 = vpack.c.bf16 %v974, %v973
  %v986 = vpack.c.bf16 %v976, %v975
  %v987 = vpack.c.bf16 %v978, %v977
  %v988 = vpack.c.bf16 %v980, %v979
  %v989 = vld [vmem:[%s9] sm:$0xf]
  %v990 = vld [vmem:[%s10] sm:$0xff]
  %992 = vset.pattern.permute.xlu0 0
  %993 = vperm.xlu0 %992, %v990
  %v994 = vpop.permute.xlu0 %993
  %v997 = vsel %vm134, %v989, 0
  %v1000 = vsel %vm134, %v981, 0
  %v1003 = vsel %vm134, %v982, 0
  %v1006 = vsel %vm134, %v983, 0
  %v1009 = vsel %vm134, %v984, 0
  %v1012 = vsel %vm134, %v985, 0
  %v1015 = vsel %vm134, %v986, 0
  %v1018 = vsel %vm134, %v987, 0
  %v1021 = vsel %vm134, %v988, 0
  %1023 = vmatprep.subr.bf16.mxu0 0
  %1024 = vmatpush1.bf16.xpose.msra.mxu0 %v1000
  %1025 = vmatprep.subr.bf16.mxu0 0
  %1026 = vmatpush1.bf16.xpose.msra.mxu0 %v1003
  %1027 = vmatprep.subr.bf16.mxu0 0
  %1028 = vmatpush1.bf16.xpose.msra.mxu0 %v1006
  %1029 = vmatprep.subr.bf16.mxu0 0
  %1030 = vmatpush1.bf16.xpose.msra.mxu0 %v1009
  %1031 = vmatprep.subr.bf16.mxu0 0
  %1032 = vmatpush1.bf16.xpose.msra.mxu0 %v1012
  %1033 = vmatprep.subr.bf16.mxu0 0
  %1034 = vmatpush1.bf16.xpose.msra.mxu0 %v1015
  %1035 = vmatprep.subr.bf16.mxu0 0
  %1036 = vmatpush1.bf16.xpose.msra.mxu0 %v1018
  %1037 = vmatprep.subr.bf16.mxu0 0
  %1038 = vmatpush1.bf16.xpose.msra.mxu0 %v1021
  %1039 = vmatprep.subr.bf16.mxu0 0
  %1040 = vmatpush1.bf16.xpose.msra.mxu0 0
  %1041 = vmatprep.subr.bf16.mxu0 0
  %1042 = vmatpush1.bf16.xpose.msra.mxu0 0
  %1043 = vmatprep.subr.bf16.mxu0 0
  %1044 = vmatpush1.bf16.xpose.msra.mxu0 0
  %1045 = vmatprep.subr.bf16.mxu0 0
  %1046 = vmatpush1.bf16.xpose.msra.mxu0 0
  %1047 = vmatprep.subr.bf16.mxu0 0
  %1048 = vmatpush1.bf16.xpose.msra.mxu0 0
  %1049 = vmatprep.subr.bf16.mxu0 0
  %1050 = vmatpush1.bf16.xpose.msra.mxu0 0
  %1051 = vmatprep.subr.bf16.mxu0 0
  %1052 = vmatpush1.bf16.xpose.msra.mxu0 0
  %1053 = vmatprep.subr.bf16.mxu0 0
  %1054 = vmatpush1.bf16.xpose.msra.mxu0 0
  %1055 = vmatprep.mubr.bf16.mxu0 0
  %1056 = vmatmul.mubr.bf16.gmra.mrb[0].mxu0 %v997
  %v1057 = vpop.f32.mrb[0].mxu0
  %v1058 = vadd.f32 %v994, %v1057
  %v1059 = vpop.f32.mrb[0].mxu0
  %v1060 = vpop.f32.mrb[0].mxu0
  %v1061 = vpop.f32.mrb[0].mxu0
  %1062 = vdwg.mxu0
  %1063 = vst [vmem:[%s11] sm:$0xff] %v1058
  // Predicated region
  $region46: #{dnn_forward.1} parent=0 // pred_check
    _
  $region47: #{dnn_forward.1} parent=0 // pred_check_branch
    %1065 = sbr.rel (0) target = $region49
  $region48: #{dnn_forward.1} parent=0 // pred_region
    _
  $region49: #{dnn_forward.1} parent=0 // pred_fallthru
    _
  // Predicated region
  $region50: #{dnn_forward.1} parent=0 // pred_check
    _
  $region51: #{dnn_forward.1} parent=0 // pred_check_branch
    %1067 = sbr.rel (0) target = $region53
  $region52: #{dnn_forward.1} parent=0 // pred_region
    _
  $region53: #{dnn_forward.1} parent=0 // pred_fallthru
    _

</llo_original>
